<compile_context>
chip_gen: v6e
topology: v6e:2x2x1
jax: 0.10.0
libtpu: 0.0.40
codegen_flags: <defaults>
</compile_context>

<pallas_src>
import functools

import jax
import jax.numpy as jnp
from jax.experimental import pallas as pl
from jax.experimental.pallas import tpu as pltpu

EPS = 1e-5


def _tpu_generation():
    """Best-effort TPU generation string ('v5e', 'v6e', 'v7x', or '')."""
    try:
        kind = jax.devices()[0].device_kind.lower()
    except Exception:
        return ""
    if "v5 lite" in kind or "v5e" in kind or "v5litepod" in kind:
        return "v5e"
    if "v6" in kind:
        return "v6e"
    if "7" in kind:
        return "v7x"
    return ""


def _vmem_limit_bytes():
    """Generation-aware scoped-VMEM limit (leave headroom for DMA buffers)."""
    try:
        cap = int(pltpu.get_tpu_info().vmem_capacity_bytes)
    except Exception:
        cap = 64 * 1024 * 1024 if _tpu_generation() == "v7x" else 128 * 1024 * 1024
    return min((cap * 3) // 4, 100 * 1024 * 1024)


def _twin_critics_kernel(
    H1, H2, split_w2s,
    state_ref, action_ref,
    w1_ref,      # (S, 2*H1)  bf16  = concat(fcs1.W^T, fcs1b.W^T) along lanes
    w2a_ref,     # (A, 2*H2)  bf16  = concat(fc2_action.W^T, fc2b_action.W^T)
    w2s_ref,     # (2*H1, 2*H2) bf16 block-diag  OR  (2, H1, H2) bf16 stacked (v5e)
    w3_ref,      # (2*H2, 2)  bf16 block-diagonal fc3 weight
    b1_ref,      # (1, 2*H1)  f32
    b2_ref,      # (1, 2*H2)  f32
    b3_ref,      # (1, 2)     f32
    q_ref,       # (B, 2) output: lane 0 = q1, lane 1 = q2
):
    f32 = jnp.float32
    bf16 = jnp.bfloat16

    # --- bn0(state): training-mode BN, single-pass stats (biased variance).
    s = state_ref[...].astype(f32)
    mu0 = jnp.mean(s, axis=0, keepdims=True)
    var0 = jnp.mean(s * s, axis=0, keepdims=True) - mu0 * mu0
    inputs = (s - mu0) * jax.lax.rsqrt(jnp.maximum(var0, 0.0) + EPS)

    # --- fcs1 / fcs1b fused into one 2*H1-wide bf16 matmul, f32 accumulation,
    # then per-column single-pass bn1/bn1b -> relu.
    h = jnp.dot(inputs.astype(bf16), w1_ref[...],
                preferred_element_type=f32) + b1_ref[...]
    mu1 = jnp.mean(h, axis=0, keepdims=True)
    var1 = jnp.mean(h * h, axis=0, keepdims=True) - mu1 * mu1
    xs = jnp.maximum((h - mu1) * jax.lax.rsqrt(jnp.maximum(var1, 0.0) + EPS), 0.0)
    xs16 = xs.astype(bf16)

    # --- fc2 / fc2b: concat((xs_i, action)) @ W2_i^T + b2_i for both critics,
    # realized as a state-path matmul + fused action-path matmul (no concat).
    if split_w2s:
        # v5e: two dense H1 x H2 matmuls; the 2*H1 x 2*H2 block-diagonal would
        # waste half of the 4x128^2 MXU tiles (and 50% of the weight DMA).
        x1 = jnp.dot(xs16[:, :H1], w2s_ref[0], preferred_element_type=f32)
        x2 = jnp.dot(xs16[:, H1:], w2s_ref[1], preferred_element_type=f32)
        x = jnp.concatenate([x1, x2], axis=1)
    else:
        # v6e/v7x: the 256-wide MXU makes the block-diagonal a single push.
        x = jnp.dot(xs16, w2s_ref[...], preferred_element_type=f32)

    x = (x
         + jnp.dot(action_ref[...].astype(bf16), w2a_ref[...],
                   preferred_element_type=f32)
         + b2_ref[...])
    x = jnp.maximum(x, 0.0)

    # --- fc3 / fc3b: block-diagonal matmul -> (B, 2), single output DMA.
    q_ref[...] = (jnp.dot(x.astype(bf16), w3_ref[...],
                          preferred_element_type=f32) + b3_ref[...])


def pack_params(p, fcs1_units, fc2_units, split_w2s=None):
    """Fuse per-critic params into the bf16 slabs the kernel consumes."""
    H1, H2 = fcs1_units, fc2_units
    if split_w2s is None:
        split_w2s = (_tpu_generation() == "v5e")
    bf16 = jnp.bfloat16

    w1cat = jnp.concatenate([p["w1"], p["w1b"]], axis=1).astype(bf16)      # (S, 2H1)
    w2a_cat = jnp.concatenate([p["w2a"], p["w2ab"]], axis=1).astype(bf16)  # (A, 2H2)

    if split_w2s:
        # Stacked dense slabs for v5e (no zero tiles on the 128x128 MXU).
        w2s = jnp.stack([p["w2s"], p["w2sb"]], axis=0).astype(bf16)        # (2, H1, H2)
    else:
        z2 = jnp.zeros((H1, H2), jnp.float32)
        w2s = jnp.concatenate(
            [jnp.concatenate([p["w2s"], z2], axis=1),
             jnp.concatenate([z2, p["w2sb"]], axis=1)], axis=0).astype(bf16)  # (2H1, 2H2)

    z3 = jnp.zeros((H2, 1), jnp.float32)
    w3_bd = jnp.concatenate(
        [jnp.concatenate([p["w3"], z3], axis=1),
         jnp.concatenate([z3, p["w3b"]], axis=1)], axis=0).astype(bf16)    # (2H2, 2)

    # Biases stay f32 (added to the f32 accumulators) and lane-aligned per layer.
    b1 = jnp.concatenate([p["b1"], p["b1b"]], axis=1)                      # (1, 2H1)
    b2 = jnp.concatenate([p["b2"], p["b2b"]], axis=1)                      # (1, 2H2)
    b3 = jnp.concatenate([p["b3"], p["b3b"]], axis=1)                      # (1, 2)

    return {
        "split_w2s": bool(split_w2s),
        "w1": w1cat, "w2a": w2a_cat, "w2s": w2s, "w3": w3_bd,
        "b1": b1, "b2": b2, "b3": b3,
    }


def twin_critics_forward(state, action, packed, fcs1_units, fc2_units):
    """packed: dict from pack_params.  Returns (q1, q2), each (B, 1)."""
    B = state.shape[0]
    args = [state, action, packed["w1"], packed["w2a"], packed["w2s"],
            packed["w3"], packed["b1"], packed["b2"], packed["b3"]]
    vmem = pl.BlockSpec(memory_space=pltpu.MemorySpace.VMEM)
    q = pl.pallas_call(
        functools.partial(_twin_critics_kernel, fcs1_units, fc2_units,
                          packed["split_w2s"]),
        out_shape=jax.ShapeDtypeStruct((B, 2), jnp.float32),
        in_specs=[vmem] * len(args),
        out_specs=vmem,
        compiler_params=pltpu.CompilerParams(vmem_limit_bytes=_vmem_limit_bytes()),
    )(*args)
    return q[:, 0:1], q[:, 1:2]


def init_params(key, state_size, action_size, fcs1_units, fc2_units):
    """Deterministic synthetic init mirroring the PyTorch layer shapes.

    Weights stored pre-transposed as (in, out); fc2 is split into the
    state-path (fcs1_units, fc2_units) and action-path (action_size,
    fc2_units) blocks.  Biases stored as (1, out).
    """
    ks = jax.random.split(key, 14)

    def u(k, shape, lim):
        return jax.random.uniform(k, shape, jnp.float32, -lim, lim)

    lim1 = 1.0 / jnp.sqrt(jnp.float32(state_size))
    lim2 = 1.0 / jnp.sqrt(jnp.float32(fcs1_units + action_size))
    lim3 = 0.003
    return {
        # critic 1
        "w1":  u(ks[0],  (state_size, fcs1_units), lim1),
        "b1":  u(ks[1],  (1, fcs1_units), lim1),
        "w2s": u(ks[2],  (fcs1_units, fc2_units), lim2),
        "w2a": u(ks[3],  (action_size, fc2_units), lim2),
        "b2":  u(ks[4],  (1, fc2_units), lim2),
        "w3":  u(ks[5],  (fc2_units, 1), lim3),
        "b3":  u(ks[6],  (1, 1), lim3),
        # critic 2
        "w1b":  u(ks[7],  (state_size, fcs1_units), lim1),
        "b1b":  u(ks[8],  (1, fcs1_units), lim1),
        "w2sb": u(ks[9],  (fcs1_units, fc2_units), lim2),
        "w2ab": u(ks[10], (action_size, fc2_units), lim2),
        "b2b":  u(ks[11], (1, fc2_units), lim2),
        "w3b":  u(ks[12], (fc2_units, 1), lim3),
        "b3b":  u(ks[13], (1, 1), lim3),
    }


def _reference_forward(state, action, p):
    """Pure-JAX f32 reference of the original (unfused) per-critic math."""
    def bn(x):
        m = jnp.mean(x, axis=0, keepdims=True)
        v = jnp.mean((x - m) ** 2, axis=0, keepdims=True)
        return (x - m) / jnp.sqrt(v + EPS)

    inputs = bn(state)

    def branch(w1, b1, w2s, w2a, b2, w3, b3):
        xs = jax.nn.relu(bn(inputs @ w1 + b1))
        x = jax.nn.relu(xs @ w2s + action @ w2a + b2)
        return x @ w3 + b3

    q1 = branch(p["w1"], p["b1"], p["w2s"], p["w2a"], p["b2"], p["w3"], p["b3"])
    q2 = branch(p["w1b"], p["b1b"], p["w2sb"], p["w2ab"], p["b2b"], p["w3b"], p["b3b"])
    return q1, q2


if __name__ == "__main__":
    # Small shapes consistent with the module's forward.  (For production,
    # feed B >= 128 (v5e) / 256 (v6e/v7x) per call — MXU rows are ~free up to
    # the systolic-array height; see TODOs for batch tiling beyond that.)
    B, STATE, ACTION = 8, 16, 8
    FCS1, FC2 = 128, 128

    key = jax.random.PRNGKey(0)
    k_state, k_action, k_params = jax.random.split(key, 3)
    state = jax.random.normal(k_state, (B, STATE), jnp.float32)
    action = jax.random.normal(k_action, (B, ACTION), jnp.float32)
    params = init_params(k_params, STATE, ACTION, FCS1, FC2)
    packed = pack_params(params, FCS1, FC2)

    q1, q2 = twin_critics_forward(state, action, packed, FCS1, FC2)
    q1 = jax.block_until_ready(q1)
    q2 = jax.block_until_ready(q2)

    # f32 reference; tolerances relaxed for the bf16 MXU matmuls.
    r1, r2 = _reference_forward(state, action, params)
    assert q1.shape == (B, 1) and q2.shape == (B, 1)
    assert jnp.allclose(q1, r1, atol=1e-2, rtol=1e-2)
    assert jnp.allclose(q2, r2, atol=1e-2, rtol=1e-2)

    print("KERNEL_OK")
</pallas_src>

<mosaic_0001>
module attributes {stable_mosaic.version = 11 : i64} {
  func.func @_twin_critics_kernel(%arg0: memref<8x16xf32, #tpu.memory_space<vmem>>, %arg1: memref<8x8xf32, #tpu.memory_space<vmem>>, %arg2: memref<16x256xbf16, #tpu.memory_space<vmem>>, %arg3: memref<8x256xbf16, #tpu.memory_space<vmem>>, %arg4: memref<256x256xbf16, #tpu.memory_space<vmem>>, %arg5: memref<256x2xbf16, #tpu.memory_space<vmem>>, %arg6: memref<1x256xf32, #tpu.memory_space<vmem>>, %arg7: memref<1x256xf32, #tpu.memory_space<vmem>>, %arg8: memref<1x2xf32, #tpu.memory_space<vmem>>, %arg9: memref<8x2xf32, #tpu.memory_space<vmem>>) attributes {dimension_semantics = [], scalar_prefetch = 0 : i64, scratch_operands = 0 : i64, tpu.core_type = #tpu.core_type<tc>} {
    %c0 = arith.constant 0 : index
    %c0_0 = arith.constant 0 : index
    %0 = vector.load %arg0[%c0, %c0_0] : memref<8x16xf32, #tpu.memory_space<vmem>>, vector<8x16xf32>
    %cst = arith.constant dense<0.000000e+00> : vector<16xf32>
    %1 = vector.multi_reduction <add>, %0, %cst [0] : vector<8x16xf32> to vector<16xf32>
    %2 = vector.shape_cast %1 : vector<16xf32> to vector<1x16xf32>
    %cst_1 = arith.constant 8.000000e+00 : f32
    %3 = vector.broadcast %cst_1 : f32 to vector<1x16xf32>
    %4 = arith.divf %2, %3 : vector<1x16xf32>
    %5 = arith.mulf %0, %0 : vector<8x16xf32>
    %cst_2 = arith.constant dense<0.000000e+00> : vector<16xf32>
    %6 = vector.multi_reduction <add>, %5, %cst_2 [0] : vector<8x16xf32> to vector<16xf32>
    %7 = vector.shape_cast %6 : vector<16xf32> to vector<1x16xf32>
    %cst_3 = arith.constant 8.000000e+00 : f32
    %8 = vector.broadcast %cst_3 : f32 to vector<1x16xf32>
    %9 = arith.divf %7, %8 : vector<1x16xf32>
    %10 = arith.mulf %4, %4 : vector<1x16xf32>
    %11 = arith.subf %9, %10 : vector<1x16xf32>
    %12 = vector.broadcast %4 : vector<1x16xf32> to vector<8x16xf32>
    %13 = arith.subf %0, %12 : vector<8x16xf32>
    %cst_4 = arith.constant 0.000000e+00 : f32
    %14 = vector.broadcast %cst_4 : f32 to vector<1x16xf32>
    %15 = arith.maximumf %11, %14 : vector<1x16xf32>
    %cst_5 = arith.constant 9.99999974E-6 : f32
    %16 = vector.broadcast %cst_5 : f32 to vector<1x16xf32>
    %17 = arith.addf %15, %16 : vector<1x16xf32>
    %18 = math.rsqrt %17 : vector<1x16xf32>
    %19 = vector.broadcast %18 : vector<1x16xf32> to vector<8x16xf32>
    %20 = arith.mulf %13, %19 : vector<8x16xf32>
    %21 = arith.truncf %20 : vector<8x16xf32> to vector<8x16xbf16>
    %c0_6 = arith.constant 0 : index
    %c0_7 = arith.constant 0 : index
    %22 = vector.load %arg2[%c0_6, %c0_7] : memref<16x256xbf16, #tpu.memory_space<vmem>>, vector<16x256xbf16>
    %cst_8 = arith.constant dense<0.000000e+00> : vector<8x256xf32>
    %23 = tpu.matmul %21, %22, %cst_8 {dimension_numbers = #tpu.dot_dimension_numbers<[1], [0], [0], [1], [0, 0, 1, 1], [], []>} : vector<8x16xbf16>, vector<16x256xbf16>, vector<8x256xf32> -> vector<8x256xf32>
    %c0_9 = arith.constant 0 : index
    %c0_10 = arith.constant 0 : index
    %24 = vector.load %arg6[%c0_9, %c0_10] : memref<1x256xf32, #tpu.memory_space<vmem>>, vector<1x256xf32>
    %25 = vector.broadcast %24 : vector<1x256xf32> to vector<8x256xf32>
    %26 = arith.addf %23, %25 : vector<8x256xf32>
    %cst_11 = arith.constant dense<0.000000e+00> : vector<256xf32>
    %27 = vector.multi_reduction <add>, %26, %cst_11 [0] : vector<8x256xf32> to vector<256xf32>
    %28 = vector.shape_cast %27 : vector<256xf32> to vector<1x256xf32>
    %cst_12 = arith.constant 8.000000e+00 : f32
    %29 = vector.broadcast %cst_12 : f32 to vector<1x256xf32>
    %30 = arith.divf %28, %29 : vector<1x256xf32>
    %31 = arith.mulf %26, %26 : vector<8x256xf32>
    %cst_13 = arith.constant dense<0.000000e+00> : vector<256xf32>
    %32 = vector.multi_reduction <add>, %31, %cst_13 [0] : vector<8x256xf32> to vector<256xf32>
    %33 = vector.shape_cast %32 : vector<256xf32> to vector<1x256xf32>
    %cst_14 = arith.constant 8.000000e+00 : f32
    %34 = vector.broadcast %cst_14 : f32 to vector<1x256xf32>
    %35 = arith.divf %33, %34 : vector<1x256xf32>
    %36 = arith.mulf %30, %30 : vector<1x256xf32>
    %37 = arith.subf %35, %36 : vector<1x256xf32>
    %38 = vector.broadcast %30 : vector<1x256xf32> to vector<8x256xf32>
    %39 = arith.subf %26, %38 : vector<8x256xf32>
    %cst_15 = arith.constant 0.000000e+00 : f32
    %40 = vector.broadcast %cst_15 : f32 to vector<1x256xf32>
    %41 = arith.maximumf %37, %40 : vector<1x256xf32>
    %cst_16 = arith.constant 9.99999974E-6 : f32
    %42 = vector.broadcast %cst_16 : f32 to vector<1x256xf32>
    %43 = arith.addf %41, %42 : vector<1x256xf32>
    %44 = math.rsqrt %43 : vector<1x256xf32>
    %45 = vector.broadcast %44 : vector<1x256xf32> to vector<8x256xf32>
    %46 = arith.mulf %39, %45 : vector<8x256xf32>
    %cst_17 = arith.constant 0.000000e+00 : f32
    %47 = vector.broadcast %cst_17 : f32 to vector<8x256xf32>
    %48 = arith.maximumf %46, %47 : vector<8x256xf32>
    %49 = arith.truncf %48 : vector<8x256xf32> to vector<8x256xbf16>
    %c0_18 = arith.constant 0 : index
    %c0_19 = arith.constant 0 : index
    %50 = vector.load %arg4[%c0_18, %c0_19] : memref<256x256xbf16, #tpu.memory_space<vmem>>, vector<256x256xbf16>
    %cst_20 = arith.constant dense<0.000000e+00> : vector<8x256xf32>
    %51 = tpu.matmul %49, %50, %cst_20 {dimension_numbers = #tpu.dot_dimension_numbers<[1], [0], [0], [1], [0, 0, 1, 1], [], []>} : vector<8x256xbf16>, vector<256x256xbf16>, vector<8x256xf32> -> vector<8x256xf32>
    %c0_21 = arith.constant 0 : index
    %c0_22 = arith.constant 0 : index
    %52 = vector.load %arg1[%c0_21, %c0_22] : memref<8x8xf32, #tpu.memory_space<vmem>>, vector<8x8xf32>
    %53 = arith.truncf %52 : vector<8x8xf32> to vector<8x8xbf16>
    %c0_23 = arith.constant 0 : index
    %c0_24 = arith.constant 0 : index
    %54 = vector.load %arg3[%c0_23, %c0_24] : memref<8x256xbf16, #tpu.memory_space<vmem>>, vector<8x256xbf16>
    %cst_25 = arith.constant dense<0.000000e+00> : vector<8x256xf32>
    %55 = tpu.matmul %53, %54, %cst_25 {dimension_numbers = #tpu.dot_dimension_numbers<[1], [0], [0], [1], [0, 0, 1, 1], [], []>} : vector<8x8xbf16>, vector<8x256xbf16>, vector<8x256xf32> -> vector<8x256xf32>
    %56 = arith.addf %51, %55 : vector<8x256xf32>
    %c0_26 = arith.constant 0 : index
    %c0_27 = arith.constant 0 : index
    %57 = vector.load %arg7[%c0_26, %c0_27] : memref<1x256xf32, #tpu.memory_space<vmem>>, vector<1x256xf32>
    %58 = vector.broadcast %57 : vector<1x256xf32> to vector<8x256xf32>
    %59 = arith.addf %56, %58 : vector<8x256xf32>
    %cst_28 = arith.constant 0.000000e+00 : f32
    %60 = vector.broadcast %cst_28 : f32 to vector<8x256xf32>
    %61 = arith.maximumf %59, %60 : vector<8x256xf32>
    %62 = arith.truncf %61 : vector<8x256xf32> to vector<8x256xbf16>
    %c0_29 = arith.constant 0 : index
    %c0_30 = arith.constant 0 : index
    %63 = vector.load %arg5[%c0_29, %c0_30] : memref<256x2xbf16, #tpu.memory_space<vmem>>, vector<256x2xbf16>
    %cst_31 = arith.constant dense<0.000000e+00> : vector<8x2xf32>
    %64 = tpu.matmul %62, %63, %cst_31 {dimension_numbers = #tpu.dot_dimension_numbers<[1], [0], [0], [1], [0, 0, 1, 1], [], []>} : vector<8x256xbf16>, vector<256x2xbf16>, vector<8x2xf32> -> vector<8x2xf32>
    %c0_32 = arith.constant 0 : index
    %c0_33 = arith.constant 0 : index
    %65 = vector.load %arg8[%c0_32, %c0_33] : memref<1x2xf32, #tpu.memory_space<vmem>>, vector<1x2xf32>
    %66 = vector.broadcast %65 : vector<1x2xf32> to vector<8x2xf32>
    %67 = arith.addf %64, %66 : vector<8x2xf32>
    %c0_34 = arith.constant 0 : index
    %c0_35 = arith.constant 0 : index
    %68 = vector.load %arg9[%c0_34, %c0_35] : memref<8x2xf32, #tpu.memory_space<vmem>>, vector<8x2xf32>
    tpu.vector_store %arg9[%c0_34, %c0_35], %67 {strides = array<i32>} : memref<8x2xf32, #tpu.memory_space<vmem>>, vector<8x2xf32>,
    return
  }
}

</mosaic_0001>

<llo_original>
// kernel: tpu_custom_call.1
$region0: #{tpu_custom_call.1}
  #allocation0 [shape = 'u32[]', space=smem, size = 0x4, offset = 0x4, fixed_abs, tag = 'smem constant byte address 0x4 - core index']
  #allocation1 [shape = 'u32[144,128]{1,0:T(1,128)}', space=vmem, size = 0x12000, scoped, tag = 'internal scratch']
  %s0 = inlined_call_operand.vmem [shape: f32[8,16], index: 0, kind: input, shape index: {}]
  %s1 = inlined_call_operand.vmem [shape: f32[8,8], index: 1, kind: input, shape index: {}]
  %s2 = inlined_call_operand.vmem [shape: bf16[16,256], index: 2, kind: input, shape index: {}]
  %s3 = inlined_call_operand.vmem [shape: bf16[8,256], index: 3, kind: input, shape index: {}]
  %s4 = inlined_call_operand.hbm [shape: bf16[256,256], index: 4, kind: input, shape index: {}]
  %s5 = inlined_call_operand.vmem [shape: bf16[256,2], index: 5, kind: input, shape index: {}]
  %s6 = inlined_call_operand.vmem [shape: f32[1,256], index: 6, kind: input, shape index: {}]
  %s7 = inlined_call_operand.vmem [shape: f32[1,256], index: 7, kind: input, shape index: {}]
  %s8 = inlined_call_operand.vmem [shape: f32[1,2], index: 8, kind: input, shape index: {}]
  %s9 = inlined_call_operand.vmem [shape: f32[8,2], index: 9, kind: output, shape index: {}]
  %s10 = sld [smem:[#allocation0]]
  $region50: #{tpu_custom_call.1} parent=0
    _
  %s12 = ssub.s32 1, %s10
  %s13 = scalar_select 0, %s12, %s10
  $region1: #{tpu_custom_call.1} parent=0
    #allocation2 [shape = 'u8[131072]{0}', space=vmem, size = 0x20000, scoped, tag = 'input window, operand 4, single buffered']
    #allocation3 [shape = 's32[1]{0}', space=sflag, size = 0x4, scoped, tag = 'scoped memory for tpu_custom_call.1']
    %14 = vsyncpa [#allocation3], 0
    // Predicated region
    $region2: #{tpu_custom_call.1} parent=1 // pred_check
      _
    $region3: #{tpu_custom_call.1} parent=1 // pred_check_branch
      %16 = sbr.rel (0) target = $region5
    $region4: #{tpu_custom_call.1} parent=1 // pred_region
      _
    $region5: #{tpu_custom_call.1} parent=1 // pred_fallthru
      _
    // Predicated region
    $region6: #{tpu_custom_call.1} parent=1 // pred_check
      _
    $region7: #{tpu_custom_call.1} parent=1 // pred_check_branch
      %18 = sbr.rel (0) target = $region9
    $region8: #{tpu_custom_call.1} parent=1 // pred_region
      _
    $region9: #{tpu_custom_call.1} parent=1 // pred_fallthru
      _
    // Predicated region
    $region10: #{tpu_custom_call.1} parent=1 // pred_check
      _
    $region11: #{tpu_custom_call.1} parent=1 // pred_check_branch
      %20 = sbr.rel (0) target = $region13
    $region12: #{tpu_custom_call.1} parent=1 // pred_region
      _
    $region13: #{tpu_custom_call.1} parent=1 // pred_fallthru
      _
    // Predicated region
    $region14: #{tpu_custom_call.1} parent=1 // pred_check
      _
    $region15: #{tpu_custom_call.1} parent=1 // pred_check_branch
      %22 = sbr.rel (0) target = $region17
    $region16: #{tpu_custom_call.1} parent=1 // pred_region
      _
    $region17: #{tpu_custom_call.1} parent=1 // pred_fallthru
      _
    // Predicated region
    $region18: #{tpu_custom_call.1} parent=1 // pred_check
      _
    $region19: #{tpu_custom_call.1} parent=1 // pred_check_branch
      %24 = sbr.rel (0) target = $region21
    $region20: #{tpu_custom_call.1} parent=1 // pred_region
      %s26 = ssub.s32 4096, 4096
      %27 = vsyncadd [#allocation3], %s26
      %s28 = sshll.u32 [#allocation2], 4
      %s29 = int_to_ptr.vmem [resolvable:$true] %s28
      %34 = dma.hbm_to_vmem [thread:$0]  %s4, 4096, %s29, [#allocation3], 128, 128, 8
    $region21: #{tpu_custom_call.1} parent=1 // pred_fallthru
      _
    // Predicated region
    $region22: #{tpu_custom_call.1} parent=1 // pred_check
      _
    $region23: #{tpu_custom_call.1} parent=1 // pred_check_branch
      %36 = sbr.rel (0) target = $region25
    $region24: #{tpu_custom_call.1} parent=1 // pred_region
      _
    $region25: #{tpu_custom_call.1} parent=1 // pred_fallthru
      _
    // Predicated region
    $region26: #{tpu_custom_call.1} parent=1 // pred_check
      _
    $region27: #{tpu_custom_call.1} parent=1 // pred_check_branch
      %38 = sbr.rel (0) target = $region29
    $region28: #{tpu_custom_call.1} parent=1 // pred_region
      _
    $region29: #{tpu_custom_call.1} parent=1 // pred_fallthru
      _
    // Predicated region
    $region30: #{tpu_custom_call.1} parent=1 // pred_check
      _
    $region31: #{tpu_custom_call.1} parent=1 // pred_check_branch
      %40 = sbr.rel (0) target = $region33
    $region32: #{tpu_custom_call.1} parent=1 // pred_region
      _
    $region33: #{tpu_custom_call.1} parent=1 // pred_fallthru
      _
    // Predicated region
    $region34: #{tpu_custom_call.1} parent=1 // pred_check
      _
    $region35: #{tpu_custom_call.1} parent=1 // pred_check_branch
      %42 = sbr.rel (0) target = $region37
    $region36: #{tpu_custom_call.1} parent=1 // pred_region
      _
    $region37: #{tpu_custom_call.1} parent=1 // pred_fallthru
      _
    // Predicated region
    $region38: #{tpu_custom_call.1} parent=1 // pred_check
      _
    $region39: #{tpu_custom_call.1} parent=1 // pred_check_branch
      %44 = sbr.rel (0) target = $region41
    $region40: #{tpu_custom_call.1} parent=1 // pred_region
      %45 = dma.done [#allocation3], 4096
    $region41: #{tpu_custom_call.1} parent=1 // pred_fallthru
      _
    %v47 = vld [vmem:[%s0] sm:$0xff]
    %vm48 = vcmask 130048
    %v49 = vsel %vm48, %v47, 0.0
    %v50 = vrot.slane %v49, 4
    %v51 = vadd.f32 %v49, %v50
    %v52 = vrot.slane %v51, 2
    %v53 = vadd.f32 %v51, %v52
    %v54 = vrot.slane %v53, 1
    %v55 = vadd.f32 %v53, %v54
    %v56 = vrcp.pop 8.0
    %v57 = vmul.f32 %v55, %v56
    %v58 = vmul.f32 %v47, %v47
    %v59 = vsel %vm48, %v58, 0.0
    %v60 = vrot.slane %v59, 4
    %v61 = vadd.f32 %v59, %v60
    %v62 = vrot.slane %v61, 2
    %v63 = vadd.f32 %v61, %v62
    %v64 = vrot.slane %v63, 1
    %v65 = vadd.f32 %v63, %v64
    %v66 = vmul.f32 %v65, %v56
    %v67 = vmul.f32 %v57, %v57
    %v68 = vsub.f32 %v66, %v67
    %v69 = vsub.f32 %v47, %v57
    %v70 = vmax.f32 %v68, 0.0
    %v71 = vadd.f32 %v70, 1e-05
    %v72 = vrsqrt.pop %v71
    %v73 = vmul.f32 %v69, %v72
    %v74 = vpack.c.bf16 %v73, %v73
    %v75 = vld [vmem:[%s2] sm:$0xff]
    %v76 = vld [vmem:[%s2 + $0x8] sm:$0xff]
    %v77 = vld [vmem:[%s6] sm:$0x3]
    %v79 = vlaneseq
    %v80 = vshrl.u32 %v79, 7
    %v81 = vsub.s32 0, %v80
    %v82 = vrot.slane %v77, %v81
    %v83 = vlaneseq
    %v84 = vshrl.u32 %v83, 7
    %v85 = vsub.s32 1, %v84
    %v86 = vrot.slane %v77, %v85
    %v91 = vunpack.c.l.b16 %v75
    %v92 = vunpack.c.h.b16 %v75
    %v93 = vunpack.c.l.b16 %v76
    %v94 = vunpack.c.h.b16 %v76
    %v95 = vpack.c.b16 %v93, %v91
    %v96 = vpack.c.b16 %v94, %v92
    %v100 = vsel %vm48, %v74, 0
    %102 = vmatprep.subr.bf16.mxu0 0
    %103 = vmatpush1.bf16.msra.mxu0 0
    %104 = vmatprep.subr.bf16.mxu0 0
    %105 = vmatpush1.bf16.msra.mxu0 0
    %106 = vmatprep.subr.bf16.mxu0 0
    %107 = vmatpush1.bf16.msra.mxu0 0
    %108 = vmatprep.subr.bf16.mxu0 0
    %109 = vmatpush1.bf16.msra.mxu0 0
    %110 = vmatprep.subr.bf16.mxu0 0
    %111 = vmatpush1.bf16.msra.mxu0 0
    %112 = vmatprep.subr.bf16.mxu0 0
    %113 = vmatpush1.bf16.msra.mxu0 0
    %114 = vmatprep.subr.bf16.mxu0 0
    %115 = vmatpush1.bf16.msra.mxu0 0
    %116 = vmatprep.subr.bf16.mxu0 %v96
    %117 = vmatpush1.bf16.msra.mxu0 %v95
    %118 = vmatprep.subr.bf16.mxu0 0
    %119 = vmatpush2.bf16.msra.mxu0 0
    %120 = vmatprep.subr.bf16.mxu0 0
    %121 = vmatpush2.bf16.msra.mxu0 0
    %122 = vmatprep.subr.bf16.mxu0 0
    %123 = vmatpush2.bf16.msra.mxu0 0
    %124 = vmatprep.subr.bf16.mxu0 0
    %125 = vmatpush2.bf16.msra.mxu0 0
    %126 = vmatprep.subr.bf16.mxu0 0
    %127 = vmatpush2.bf16.msra.mxu0 0
    %128 = vmatprep.subr.bf16.mxu0 0
    %129 = vmatpush2.bf16.msra.mxu0 0
    %130 = vmatprep.subr.bf16.mxu0 0
    %131 = vmatpush2.bf16.msra.mxu0 0
    %132 = vmatprep.subr.bf16.mxu0 0
    %133 = vmatpush2.bf16.msra.mxu0 0
    %134 = vmatprep.mubr.bf16.mxu0 0
    %135 = vmatmul.mubr.bf16.gmra.mxu0 %v100
    %v136 = vpop.f32.mrf.mxu0
    %v137 = vadd.f32 %v82, %v136
    %v138 = vpop.f32.mrf.mxu0
    %v139 = vadd.f32 %v86, %v138
    %v140 = vpop.f32.mrf.mxu0
    %v141 = vpop.f32.mrf.mxu0
    %142 = vdwg.mxu0
    %v143 = vrot.slane %v137, 4
    %v144 = vadd.f32 %v137, %v143
    %v145 = vrot.slane %v144, 2
    %v146 = vadd.f32 %v144, %v145
    %v147 = vrot.slane %v146, 1
    %v148 = vadd.f32 %v146, %v147
    %v149 = vrot.slane %v139, 4
    %v150 = vadd.f32 %v139, %v149
    %v151 = vrot.slane %v150, 2
    %v152 = vadd.f32 %v150, %v151
    %v153 = vrot.slane %v152, 1
    %v154 = vadd.f32 %v152, %v153
    %v155 = vmul.f32 %v148, %v56
    %v156 = vmul.f32 %v154, %v56
    %v157 = vmul.f32 %v137, %v137
    %v158 = vmul.f32 %v139, %v139
    %v159 = vrot.slane %v157, 4
    %v160 = vadd.f32 %v157, %v159
    %v161 = vrot.slane %v160, 2
    %v162 = vadd.f32 %v160, %v161
    %v163 = vrot.slane %v162, 1
    %v164 = vadd.f32 %v162, %v163
    %v165 = vrot.slane %v158, 4
    %v166 = vadd.f32 %v158, %v165
    %v167 = vrot.slane %v166, 2
    %v168 = vadd.f32 %v166, %v167
    %v169 = vrot.slane %v168, 1
    %v170 = vadd.f32 %v168, %v169
    %v171 = vmul.f32 %v164, %v56
    %v172 = vmul.f32 %v170, %v56
    %v173 = vmul.f32 %v155, %v155
    %v174 = vmul.f32 %v156, %v156
    %v175 = vsub.f32 %v171, %v173
    %v176 = vsub.f32 %v172, %v174
    %v177 = vsub.f32 %v137, %v155
    %v178 = vsub.f32 %v139, %v156
    %v179 = vmax.f32 %v175, 0.0
    %v180 = vmax.f32 %v176, 0.0
    %v181 = vadd.f32 %v179, 1e-05
    %v182 = vadd.f32 %v180, 1e-05
    %v183 = vrsqrt.pop %v181
    %v184 = vrsqrt.pop %v182
    %v185 = vmul.f32 %v177, %v183
    %v186 = vmul.f32 %v178, %v184
    %v187 = vmax.f32 %v185, 0.0
    %v188 = vmax.f32 %v186, 0.0
    %v189 = vpack.c.bf16 %v187, %v187
    %v190 = vpack.c.bf16 %v188, %v188
    %v191 = vld [vmem:[#allocation2] sm:$0xff]
    %v192 = vld [vmem:[#allocation2 + $0x8] sm:$0xff]
    %v193 = vld [vmem:[#allocation2 + $0x10] sm:$0xff]
    %v194 = vld [vmem:[#allocation2 + $0x18] sm:$0xff]
    %v195 = vld [vmem:[#allocation2 + $0x20] sm:$0xff]
    %v196 = vld [vmem:[#allocation2 + $0x28] sm:$0xff]
    %v197 = vld [vmem:[#allocation2 + $0x30] sm:$0xff]
    %v198 = vld [vmem:[#allocation2 + $0x38] sm:$0xff]
    %v199 = vld [vmem:[#allocation2 + $0x40] sm:$0xff]
    %v200 = vld [vmem:[#allocation2 + $0x48] sm:$0xff]
    %v201 = vld [vmem:[#allocation2 + $0x50] sm:$0xff]
    %v202 = vld [vmem:[#allocation2 + $0x58] sm:$0xff]
    %v203 = vld [vmem:[#allocation2 + $0x60] sm:$0xff]
    %v204 = vld [vmem:[#allocation2 + $0x68] sm:$0xff]
    %v205 = vld [vmem:[#allocation2 + $0x70] sm:$0xff]
    %v206 = vld [vmem:[#allocation2 + $0x78] sm:$0xff]
    %v207 = vld [vmem:[#allocation2 + $0x80] sm:$0xff]
    %v208 = vld [vmem:[#allocation2 + $0x88] sm:$0xff]
    %v209 = vld [vmem:[#allocation2 + $0x90] sm:$0xff]
    %v210 = vld [vmem:[#allocation2 + $0x98] sm:$0xff]
    %v211 = vld [vmem:[#allocation2 + $0xa0] sm:$0xff]
    %v212 = vld [vmem:[#allocation2 + $0xa8] sm:$0xff]
    %v213 = vld [vmem:[#allocation2 + $0xb0] sm:$0xff]
    %v214 = vld [vmem:[#allocation2 + $0xb8] sm:$0xff]
    %v215 = vld [vmem:[#allocation2 + $0xc0] sm:$0xff]
    %v216 = vld [vmem:[#allocation2 + $0xc8] sm:$0xff]
    %v217 = vld [vmem:[#allocation2 + $0xd0] sm:$0xff]
    %v218 = vld [vmem:[#allocation2 + $0xd8] sm:$0xff]
    %v219 = vld [vmem:[#allocation2 + $0xe0] sm:$0xff]
    %v220 = vld [vmem:[#allocation2 + $0xe8] sm:$0xff]
    %v221 = vld [vmem:[#allocation2 + $0xf0] sm:$0xff]
    %v222 = vld [vmem:[#allocation2 + $0xf8] sm:$0xff]
    %v223 = vld [vmem:[%s1] sm:$0xff]
    %v224 = vpack.c.bf16 %v223, %v223
    %v225 = vld [vmem:[%s3] sm:$0xff]
    %v227 = vunpack.c.l.b16 %v225
    %v228 = vunpack.c.h.b16 %v225
    %v229 = vpack.c.b16 %v227, %v227
    %v230 = vpack.c.b16 %v228, %v228
    %vm231 = vcmask 64512
    %v233 = vsel %vm231, %v224, 0
    %vm235 = vcmask 1043456
    %v237 = vsel %vm235, %v229, 0
    %v240 = vsel %vm235, %v230, 0
    %242 = vmatprep.subr.bf16.mxu0 0
    %243 = vmatpush1.bf16.msra.mxu0 0
    %244 = vmatprep.subr.bf16.mxu0 0
    %245 = vmatpush1.bf16.msra.mxu0 0
    %246 = vmatprep.subr.bf16.mxu0 0
    %247 = vmatpush1.bf16.msra.mxu0 0
    %248 = vmatprep.subr.bf16.mxu0 0
    %249 = vmatpush1.bf16.msra.mxu0 0
    %250 = vmatprep.subr.bf16.mxu0 0
    %251 = vmatpush1.bf16.msra.mxu0 0
    %252 = vmatprep.subr.bf16.mxu0 0
    %253 = vmatpush1.bf16.msra.mxu0 0
    %254 = vmatprep.subr.bf16.mxu0 0
    %255 = vmatpush1.bf16.msra.mxu0 0
    %256 = vmatprep.subr.bf16.mxu0 %v240
    %257 = vmatpush1.bf16.msra.mxu0 %v237
    %258 = vmatprep.subr.bf16.mxu0 0
    %259 = vmatpush2.bf16.msra.mxu0 0
    %260 = vmatprep.subr.bf16.mxu0 0
    %261 = vmatpush2.bf16.msra.mxu0 0
    %262 = vmatprep.subr.bf16.mxu0 0
    %263 = vmatpush2.bf16.msra.mxu0 0
    %264 = vmatprep.subr.bf16.mxu0 0
    %265 = vmatpush2.bf16.msra.mxu0 0
    %266 = vmatprep.subr.bf16.mxu0 0
    %267 = vmatpush2.bf16.msra.mxu0 0
    %268 = vmatprep.subr.bf16.mxu0 0
    %269 = vmatpush2.bf16.msra.mxu0 0
    %270 = vmatprep.subr.bf16.mxu0 0
    %271 = vmatpush2.bf16.msra.mxu0 0
    %272 = vmatprep.subr.bf16.mxu0 0
    %273 = vmatpush2.bf16.msra.mxu0 0
    %274 = vmatprep.mubr.bf16.mxu0 0
    %275 = vmatmul.mubr.bf16.gmra.mxu0 %v233
    %v276 = vpop.f32.mrf.mxu0
    %v277 = vadd.f32 0.0, %v276
    %v278 = vpop.f32.mrf.mxu0
    %v279 = vadd.f32 0.0, %v278
    %v280 = vpop.f32.mrf.mxu0
    %v281 = vpop.f32.mrf.mxu0
    %282 = vdwg.mxu0
    %v315 = vunpack.c.l.b16 %v191
    %v316 = vunpack.c.h.b16 %v191
    %v317 = vunpack.c.l.b16 %v192
    %v318 = vunpack.c.h.b16 %v192
    %v319 = vunpack.c.l.b16 %v193
    %v320 = vunpack.c.h.b16 %v193
    %v321 = vunpack.c.l.b16 %v194
    %v322 = vunpack.c.h.b16 %v194
    %v323 = vunpack.c.l.b16 %v195
    %v324 = vunpack.c.h.b16 %v195
    %v325 = vunpack.c.l.b16 %v196
    %v326 = vunpack.c.h.b16 %v196
    %v327 = vunpack.c.l.b16 %v197
    %v328 = vunpack.c.h.b16 %v197
    %v329 = vunpack.c.l.b16 %v198
    %v330 = vunpack.c.h.b16 %v198
    %v331 = vunpack.c.l.b16 %v199
    %v332 = vunpack.c.h.b16 %v199
    %v333 = vunpack.c.l.b16 %v200
    %v334 = vunpack.c.h.b16 %v200
    %v335 = vunpack.c.l.b16 %v201
    %v336 = vunpack.c.h.b16 %v201
    %v337 = vunpack.c.l.b16 %v202
    %v338 = vunpack.c.h.b16 %v202
    %v339 = vunpack.c.l.b16 %v203
    %v340 = vunpack.c.h.b16 %v203
    %v341 = vunpack.c.l.b16 %v204
    %v342 = vunpack.c.h.b16 %v204
    %v343 = vunpack.c.l.b16 %v205
    %v344 = vunpack.c.h.b16 %v205
    %v345 = vunpack.c.l.b16 %v206
    %v346 = vunpack.c.h.b16 %v206
    %v347 = vunpack.c.l.b16 %v207
    %v348 = vunpack.c.h.b16 %v207
    %v349 = vunpack.c.l.b16 %v208
    %v350 = vunpack.c.h.b16 %v208
    %v351 = vunpack.c.l.b16 %v209
    %v352 = vunpack.c.h.b16 %v209
    %v353 = vunpack.c.l.b16 %v210
    %v354 = vunpack.c.h.b16 %v210
    %v355 = vunpack.c.l.b16 %v211
    %v356 = vunpack.c.h.b16 %v211
    %v357 = vunpack.c.l.b16 %v212
    %v358 = vunpack.c.h.b16 %v212
    %v359 = vunpack.c.l.b16 %v213
    %v360 = vunpack.c.h.b16 %v213
    %v361 = vunpack.c.l.b16 %v214
    %v362 = vunpack.c.h.b16 %v214
    %v363 = vunpack.c.l.b16 %v215
    %v364 = vunpack.c.h.b16 %v215
    %v365 = vunpack.c.l.b16 %v216
    %v366 = vunpack.c.h.b16 %v216
    %v367 = vunpack.c.l.b16 %v217
    %v368 = vunpack.c.h.b16 %v217
    %v369 = vunpack.c.l.b16 %v218
    %v370 = vunpack.c.h.b16 %v218
    %v371 = vunpack.c.l.b16 %v219
    %v372 = vunpack.c.h.b16 %v219
    %v373 = vunpack.c.l.b16 %v220
    %v374 = vunpack.c.h.b16 %v220
    %v375 = vunpack.c.l.b16 %v221
    %v376 = vunpack.c.h.b16 %v221
    %v377 = vunpack.c.l.b16 %v222
    %v378 = vunpack.c.h.b16 %v222
    %v379 = vpack.c.b16 %v317, %v315
    %v380 = vpack.c.b16 %v318, %v316
    %v381 = vpack.c.b16 %v321, %v319
    %v382 = vpack.c.b16 %v322, %v320
    %v383 = vpack.c.b16 %v325, %v323
    %v384 = vpack.c.b16 %v326, %v324
    %v385 = vpack.c.b16 %v329, %v327
    %v386 = vpack.c.b16 %v330, %v328
    %v387 = vpack.c.b16 %v333, %v331
    %v388 = vpack.c.b16 %v334, %v332
    %v389 = vpack.c.b16 %v337, %v335
    %v390 = vpack.c.b16 %v338, %v336
    %v391 = vpack.c.b16 %v341, %v339
    %v392 = vpack.c.b16 %v342, %v340
    %v393 = vpack.c.b16 %v345, %v343
    %v394 = vpack.c.b16 %v346, %v344
    %v395 = vpack.c.b16 %v349, %v347
    %v396 = vpack.c.b16 %v350, %v348
    %v397 = vpack.c.b16 %v353, %v351
    %v398 = vpack.c.b16 %v354, %v352
    %v399 = vpack.c.b16 %v357, %v355
    %v400 = vpack.c.b16 %v358, %v356
    %v401 = vpack.c.b16 %v361, %v359
    %v402 = vpack.c.b16 %v362, %v360
    %v403 = vpack.c.b16 %v365, %v363
    %v404 = vpack.c.b16 %v366, %v364
    %v405 = vpack.c.b16 %v369, %v367
    %v406 = vpack.c.b16 %v370, %v368
    %v407 = vpack.c.b16 %v373, %v371
    %v408 = vpack.c.b16 %v374, %v372
    %v409 = vpack.c.b16 %v377, %v375
    %v410 = vpack.c.b16 %v378, %v376
    %443 = vmatprep.subr.bf16.mxu0 %v394
    %444 = vmatpush1.bf16.msra.mxu0 %v393
    %445 = vmatprep.subr.bf16.mxu0 %v392
    %446 = vmatpush1.bf16.msra.mxu0 %v391
    %447 = vmatprep.subr.bf16.mxu0 %v390
    %448 = vmatpush1.bf16.msra.mxu0 %v389
    %449 = vmatprep.subr.bf16.mxu0 %v388
    %450 = vmatpush1.bf16.msra.mxu0 %v387
    %451 = vmatprep.subr.bf16.mxu0 %v386
    %452 = vmatpush1.bf16.msra.mxu0 %v385
    %453 = vmatprep.subr.bf16.mxu0 %v384
    %454 = vmatpush1.bf16.msra.mxu0 %v383
    %455 = vmatprep.subr.bf16.mxu0 %v382
    %456 = vmatpush1.bf16.msra.mxu0 %v381
    %457 = vmatprep.subr.bf16.mxu0 %v380
    %458 = vmatpush1.bf16.msra.mxu0 %v379
    %459 = vmatprep.subr.bf16.mxu0 %v410
    %460 = vmatpush2.bf16.msra.mxu0 %v409
    %461 = vmatprep.subr.bf16.mxu0 %v408
    %462 = vmatpush2.bf16.msra.mxu0 %v407
    %463 = vmatprep.subr.bf16.mxu0 %v406
    %464 = vmatpush2.bf16.msra.mxu0 %v405
    %465 = vmatprep.subr.bf16.mxu0 %v404
    %466 = vmatpush2.bf16.msra.mxu0 %v403
    %467 = vmatprep.subr.bf16.mxu0 %v402
    %468 = vmatpush2.bf16.msra.mxu0 %v401
    %469 = vmatprep.subr.bf16.mxu0 %v400
    %470 = vmatpush2.bf16.msra.mxu0 %v399
    %471 = vmatprep.subr.bf16.mxu0 %v398
    %472 = vmatpush2.bf16.msra.mxu0 %v397
    %473 = vmatprep.subr.bf16.mxu0 %v396
    %474 = vmatpush2.bf16.msra.mxu0 %v395
    %475 = vmatprep.mubr.bf16.mxu0 %v190
    %476 = vmatmul.mubr.bf16.gmra.mxu0 %v189
    %v477 = vpop.f32.mrf.mxu0
    %v478 = vadd.f32 %v277, %v477
    %v479 = vpop.f32.mrf.mxu0
    %v480 = vadd.f32 %v279, %v479
    %v481 = vpop.f32.mrf.mxu0
    %v482 = vpop.f32.mrf.mxu0
    %483 = vdwg.mxu0
    %v484 = vld [vmem:[%s7] sm:$0x3]
    %v486 = vlaneseq
    %v487 = vshrl.u32 %v486, 7
    %v488 = vsub.s32 0, %v487
    %v489 = vrot.slane %v484, %v488
    %v490 = vlaneseq
    %v491 = vshrl.u32 %v490, 7
    %v492 = vsub.s32 1, %v491
    %v493 = vrot.slane %v484, %v492
    %v496 = vadd.f32 %v478, %v489
    %v497 = vadd.f32 %v480, %v493
    %v498 = vmax.f32 %v496, 0.0
    %v499 = vmax.f32 %v497, 0.0
    %v500 = vpack.c.bf16 %v498, %v498
    %v501 = vpack.c.bf16 %v499, %v499
    %v502 = vld [vmem:[%s5] sm:$0xf]
    %v503 = vld [vmem:[%s5 + $0x4] sm:$0xf]
    %v504 = vld [vmem:[%s5 + $0x8] sm:$0xf]
    %v505 = vld [vmem:[%s5 + $0xc] sm:$0xf]
    %v506 = vld [vmem:[%s5 + $0x10] sm:$0xf]
    %v507 = vld [vmem:[%s5 + $0x14] sm:$0xf]
    %v508 = vld [vmem:[%s5 + $0x18] sm:$0xf]
    %v509 = vld [vmem:[%s5 + $0x1c] sm:$0xf]
    %v510 = vld [vmem:[%s5 + $0x20] sm:$0xf]
    %v511 = vld [vmem:[%s5 + $0x24] sm:$0xf]
    %v512 = vld [vmem:[%s5 + $0x28] sm:$0xf]
    %v513 = vld [vmem:[%s5 + $0x2c] sm:$0xf]
    %v514 = vld [vmem:[%s5 + $0x30] sm:$0xf]
    %v515 = vld [vmem:[%s5 + $0x34] sm:$0xf]
    %v516 = vld [vmem:[%s5 + $0x38] sm:$0xf]
    %v517 = vld [vmem:[%s5 + $0x3c] sm:$0xf]
    %v518 = vld [vmem:[%s5 + $0x40] sm:$0xf]
    %v519 = vld [vmem:[%s5 + $0x44] sm:$0xf]
    %v520 = vld [vmem:[%s5 + $0x48] sm:$0xf]
    %v521 = vld [vmem:[%s5 + $0x4c] sm:$0xf]
    %v522 = vld [vmem:[%s5 + $0x50] sm:$0xf]
    %v523 = vld [vmem:[%s5 + $0x54] sm:$0xf]
    %v524 = vld [vmem:[%s5 + $0x58] sm:$0xf]
    %v525 = vld [vmem:[%s5 + $0x5c] sm:$0xf]
    %v526 = vld [vmem:[%s5 + $0x60] sm:$0xf]
    %v527 = vld [vmem:[%s5 + $0x64] sm:$0xf]
    %v528 = vld [vmem:[%s5 + $0x68] sm:$0xf]
    %v529 = vld [vmem:[%s5 + $0x6c] sm:$0xf]
    %v530 = vld [vmem:[%s5 + $0x70] sm:$0xf]
    %v531 = vld [vmem:[%s5 + $0x74] sm:$0xf]
    %v532 = vld [vmem:[%s5 + $0x78] sm:$0xf]
    %v533 = vld [vmem:[%s5 + $0x7c] sm:$0xf]
    %v534 = vld [vmem:[%s8] sm:$0x1]
    %v536 = vlaneseq
    %v537 = vshrl.u32 %v536, 7
    %v538 = vsub.s32 0, %v537
    %v539 = vrot.slane %v534, %v538
    %v573 = vunpack.c.l.b16 %v502
    %v574 = vunpack.c.l.b16 %v503
    %v575 = vunpack.c.l.b16 %v504
    %v576 = vunpack.c.l.b16 %v505
    %v577 = vunpack.c.l.b16 %v506
    %v578 = vunpack.c.l.b16 %v507
    %v579 = vunpack.c.l.b16 %v508
    %v580 = vunpack.c.l.b16 %v509
    %v581 = vunpack.c.l.b16 %v510
    %v582 = vunpack.c.l.b16 %v511
    %v583 = vunpack.c.l.b16 %v512
    %v584 = vunpack.c.l.b16 %v513
    %v585 = vunpack.c.l.b16 %v514
    %v586 = vunpack.c.l.b16 %v515
    %v587 = vunpack.c.l.b16 %v516
    %v588 = vunpack.c.l.b16 %v517
    %v589 = vunpack.c.l.b16 %v518
    %v590 = vunpack.c.l.b16 %v519
    %v591 = vunpack.c.l.b16 %v520
    %v592 = vunpack.c.l.b16 %v521
    %v593 = vunpack.c.l.b16 %v522
    %v594 = vunpack.c.l.b16 %v523
    %v595 = vunpack.c.l.b16 %v524
    %v596 = vunpack.c.l.b16 %v525
    %v597 = vunpack.c.l.b16 %v526
    %v598 = vunpack.c.l.b16 %v527
    %v599 = vunpack.c.l.b16 %v528
    %v600 = vunpack.c.l.b16 %v529
    %v601 = vunpack.c.l.b16 %v530
    %v602 = vunpack.c.l.b16 %v531
    %v603 = vunpack.c.l.b16 %v532
    %v604 = vunpack.c.l.b16 %v533
    %v605 = vpack.c.b16 %v574, %v573
    %v606 = vpack.c.b16 %v576, %v575
    %v607 = vpack.c.b16 %v578, %v577
    %v608 = vpack.c.b16 %v580, %v579
    %v609 = vpack.c.b16 %v582, %v581
    %v610 = vpack.c.b16 %v584, %v583
    %v611 = vpack.c.b16 %v586, %v585
    %v612 = vpack.c.b16 %v588, %v587
    %v613 = vpack.c.b16 %v590, %v589
    %v614 = vpack.c.b16 %v592, %v591
    %v615 = vpack.c.b16 %v594, %v593
    %v616 = vpack.c.b16 %v596, %v595
    %v617 = vpack.c.b16 %v598, %v597
    %v618 = vpack.c.b16 %v600, %v599
    %v619 = vpack.c.b16 %v602, %v601
    %v620 = vpack.c.b16 %v604, %v603
    %637 = vmatprep.subr.bf16.mxu0 0
    %638 = vmatpush1.bf16.msra.mxu0 %v612
    %639 = vmatprep.subr.bf16.mxu0 0
    %640 = vmatpush1.bf16.msra.mxu0 %v611
    %641 = vmatprep.subr.bf16.mxu0 0
    %642 = vmatpush1.bf16.msra.mxu0 %v610
    %643 = vmatprep.subr.bf16.mxu0 0
    %644 = vmatpush1.bf16.msra.mxu0 %v609
    %645 = vmatprep.subr.bf16.mxu0 0
    %646 = vmatpush1.bf16.msra.mxu0 %v608
    %647 = vmatprep.subr.bf16.mxu0 0
    %648 = vmatpush1.bf16.msra.mxu0 %v607
    %649 = vmatprep.subr.bf16.mxu0 0
    %650 = vmatpush1.bf16.msra.mxu0 %v606
    %651 = vmatprep.subr.bf16.mxu0 0
    %652 = vmatpush1.bf16.msra.mxu0 %v605
    %653 = vmatprep.subr.bf16.mxu0 0
    %654 = vmatpush2.bf16.msra.mxu0 %v620
    %655 = vmatprep.subr.bf16.mxu0 0
    %656 = vmatpush2.bf16.msra.mxu0 %v619
    %657 = vmatprep.subr.bf16.mxu0 0
    %658 = vmatpush2.bf16.msra.mxu0 %v618
    %659 = vmatprep.subr.bf16.mxu0 0
    %660 = vmatpush2.bf16.msra.mxu0 %v617
    %661 = vmatprep.subr.bf16.mxu0 0
    %662 = vmatpush2.bf16.msra.mxu0 %v616
    %663 = vmatprep.subr.bf16.mxu0 0
    %664 = vmatpush2.bf16.msra.mxu0 %v615
    %665 = vmatprep.subr.bf16.mxu0 0
    %666 = vmatpush2.bf16.msra.mxu0 %v614
    %667 = vmatprep.subr.bf16.mxu0 0
    %668 = vmatpush2.bf16.msra.mxu0 %v613
    %669 = vmatprep.mubr.bf16.mxu0 %v501
    %670 = vmatmul.mubr.bf16.gmra.mxu0 %v500
    %v671 = vpop.f32.mrf.mxu0
    %v672 = vadd.f32 %v539, %v671
    %v673 = vpop.f32.mrf.mxu0
    %v674 = vpop.f32.mrf.mxu0
    %v675 = vpop.f32.mrf.mxu0
    %676 = vdwg.mxu0
    %vm677 = vcmask 15360
    %678 = vst.msk [vmem:[%s9] sm:$0xff] %vm677, %v672
    // Predicated region
    $region42: #{tpu_custom_call.1} parent=1 // pred_check
      _
    $region43: #{tpu_custom_call.1} parent=1 // pred_check_branch
      %680 = sbr.rel (0) target = $region45
    $region44: #{tpu_custom_call.1} parent=1 // pred_region
      _
    $region45: #{tpu_custom_call.1} parent=1 // pred_fallthru
      _
    // Predicated region
    $region46: #{tpu_custom_call.1} parent=1 // pred_check
      _
    $region47: #{tpu_custom_call.1} parent=1 // pred_check_branch
      %682 = sbr.rel (0) target = $region49
    $region48: #{tpu_custom_call.1} parent=1 // pred_region
      _
    $region49: #{tpu_custom_call.1} parent=1 // pred_fallthru
      _
    %683 = vsyncpa [#allocation3], 1

</llo_original>
